<compile_context>
chip_gen: v6e
topology: v6e:2x2x1
jax: 0.10.0
libtpu: 0.0.40
codegen_flags: <defaults>
</compile_context>

<pallas_src>
import math
from functools import partial

import jax
import jax.numpy as jnp
from jax.experimental import pallas as pl
from jax.experimental.pallas import tpu as pltpu


def _round_up(x, m):
    return ((x + m - 1) // m) * m


def _mlp_kernel(x_ref, w1_ref, b1_ref, w2_ref, b2_ref, o_ref):
    """x: (S, TB); w1: (H, S); b1: (H, 1); w2: (A, H); b2: (A, 1); o: (A, TB)."""
    x = x_ref[...]
    hid = jnp.dot(w1_ref[...], x, preferred_element_type=jnp.float32) + b1_ref[...]
    hid = jnp.maximum(hid, 0.0)
    out = jnp.dot(w2_ref[...], hid, preferred_element_type=jnp.float32) + b2_ref[...]
    o_ref[...] = out.astype(o_ref.dtype)


@partial(jax.jit, static_argnames=("block_b",))
def policy_forward_pallas(state, w1, b1, w2, b2, block_b=32768):
    """state: [B, S] f32; w1: [H, S]; b1: [H]; w2: [A, H]; b2: [A] (torch layout).

    Returns action means [B, A] = relu(state @ w1.T + b1) @ w2.T + b2.
    """
    B, S = state.shape
    H = w1.shape[0]
    A = w2.shape[0]

    # Batch on lanes: pad to a multiple of 128; pick the tile so any realistic
    # MC batch collapses to one grid step.
    tb = min(_round_up(block_b, 128), _round_up(B, 128))
    Bp = _round_up(B, tb)

    xt = state.T                                   # (S, B): layout plumbing only
    if Bp != B:
        xt = jnp.pad(xt, ((0, 0), (0, Bp - B)))    # padded lanes sliced off below

    b1c = b1.reshape(H, 1)
    b2c = b2.reshape(A, 1)

    out_t = pl.pallas_call(
        _mlp_kernel,
        out_shape=jax.ShapeDtypeStruct((A, Bp), jnp.float32),
        grid_spec=pltpu.PrefetchScalarGridSpec(
            num_scalar_prefetch=0,
            grid=(Bp // tb,),
            in_specs=[
                pl.BlockSpec((S, tb), lambda i: (0, i)),   # lane-dense state tile
                pl.BlockSpec((H, S), lambda i: (0, 0)),    # resident W1
                pl.BlockSpec((H, 1), lambda i: (0, 0)),    # resident b1 column
                pl.BlockSpec((A, H), lambda i: (0, 0)),    # resident W2
                pl.BlockSpec((A, 1), lambda i: (0, 0)),    # resident b2 column
            ],
            out_specs=pl.BlockSpec((A, tb), lambda i: (0, i)),  # lane-dense output
        ),
        compiler_params=pltpu.CompilerParams(
            dimension_semantics=("arbitrary",),
        ),
    )(xt, w1, b1c, w2, b2c)

    return out_t[:, :B].T                          # back to (B, A)


@jax.jit
def policy_forward_xla(state, w1, b1, w2, b2):
    """Plain fused-XLA fallback for tiny batches (get_action path)."""
    return jnp.maximum(state @ w1.T + b1, 0.0) @ w2.T + b2


def policy_forward(state, w1, b1, w2, b2, block_b=32768, min_pallas_batch=128):
    """Dispatch: large MC batches -> Pallas kernel, tiny ones -> fused XLA."""
    if state.shape[0] < min_pallas_batch:
        return policy_forward_xla(state, w1, b1, w2, b2)
    return policy_forward_pallas(state, w1, b1, w2, b2, block_b=block_b)


def _init_linear(key, fan_in, fan_out):
    # Mimic torch.nn.Linear default init U(-1/sqrt(fan_in), +1/sqrt(fan_in)).
    # Weight stored torch-style: [out_features, in_features].
    k_w, k_b = jax.random.split(key)
    bound = 1.0 / math.sqrt(fan_in)
    w = jax.random.uniform(k_w, (fan_out, fan_in), jnp.float32, -bound, bound)
    b = jax.random.uniform(k_b, (fan_out,), jnp.float32, -bound, bound)
    return w, b


def _ref_forward(state, w1, b1, w2, b2):
    return jnp.maximum(state @ w1.T + b1, 0.0) @ w2.T + b2


if __name__ == "__main__":
    # Shapes implied by the module: env with state_space=4, hidden=16
    # (hard-coded), action_space=2.
    STATE_SPACE = 4
    HIDDEN = 16
    ACTION_SPACE = 2

    key = jax.random.PRNGKey(0)
    k_x, k_l1, k_l2, k_big = jax.random.split(key, 4)

    w1, b1 = _init_linear(k_l1, STATE_SPACE, HIDDEN)
    w2, b2 = _init_linear(k_l2, HIDDEN, ACTION_SPACE)

    # 1) Small batch through the Pallas kernel (forced), as in the module's
    #    direct forward() usage.  One 128-lane grid step.
    B_small = 8
    state = jax.random.normal(k_x, (B_small, STATE_SPACE), jnp.float32)
    out = jax.block_until_ready(policy_forward_pallas(state, w1, b1, w2, b2))
    ref = _ref_forward(state, w1, b1, w2, b2)
    assert out.shape == (B_small, ACTION_SPACE)
    assert jnp.allclose(out, ref, atol=1e-5, rtol=1e-5)

    # 2) Large MC-rollout batch: lane-dense layout, single big grid step,
    #    weights resident in VMEM.
    B_big = 2048
    state_big = jax.random.normal(k_big, (B_big, STATE_SPACE), jnp.float32)
    out_big = jax.block_until_ready(policy_forward(state_big, w1, b1, w2, b2))
    ref_big = _ref_forward(state_big, w1, b1, w2, b2)
    assert out_big.shape == (B_big, ACTION_SPACE)
    assert jnp.allclose(out_big, ref_big, atol=1e-5, rtol=1e-5)

    # 3) Tiny-batch dispatcher path (XLA fallback) still matches.
    out_small_fb = jax.block_until_ready(policy_forward(state, w1, b1, w2, b2))
    assert jnp.allclose(out_small_fb, ref, atol=1e-5, rtol=1e-5)

    # TODO(synk): get_action sampling/clipping, Adam step, critic calls and
    # TensorBoard logging are host/training-side logic outside the forward
    # hot path; not kernelized.
    print("KERNEL_OK")
</pallas_src>

<mosaic_0001>
module attributes {stable_mosaic.version = 11 : i64} {
  func.func @_mlp_kernel(%arg0: i32, %arg1: memref<4x128xf32, #tpu.memory_space<vmem>>, %arg2: memref<16x4xf32, #tpu.memory_space<vmem>>, %arg3: memref<16x1xf32, #tpu.memory_space<vmem>>, %arg4: memref<2x16xf32, #tpu.memory_space<vmem>>, %arg5: memref<2x1xf32, #tpu.memory_space<vmem>>, %arg6: memref<2x128xf32, #tpu.memory_space<vmem>>) attributes {dimension_semantics = [#tpu.dimension_semantics<arbitrary>], iteration_bounds = array<i64: 1>, scalar_prefetch = 0 : i64, scratch_operands = 0 : i64, tpu.core_type = #tpu.core_type<tc>, window_params = [{transform_indices = @transform_0, window_bounds = array<i64: 4, 128>}, {pipeline_mode = #tpu.pipeline_mode<synchronous>, transform_indices = @transform_1, window_bounds = array<i64: 16, 4>}, {pipeline_mode = #tpu.pipeline_mode<synchronous>, transform_indices = @transform_2, window_bounds = array<i64: 16, 1>}, {pipeline_mode = #tpu.pipeline_mode<synchronous>, transform_indices = @transform_3, window_bounds = array<i64: 2, 16>}, {pipeline_mode = #tpu.pipeline_mode<synchronous>, transform_indices = @transform_4, window_bounds = array<i64: 2, 1>}, {transform_indices = @transform_5, window_bounds = array<i64: 2, 128>}]} {
    %c0 = arith.constant 0 : index
    %c0_0 = arith.constant 0 : index
    %0 = vector.load %arg1[%c0, %c0_0] : memref<4x128xf32, #tpu.memory_space<vmem>>, vector<4x128xf32>
    %c0_1 = arith.constant 0 : index
    %c0_2 = arith.constant 0 : index
    %1 = vector.load %arg2[%c0_1, %c0_2] : memref<16x4xf32, #tpu.memory_space<vmem>>, vector<16x4xf32>
    %cst = arith.constant dense<0.000000e+00> : vector<16x128xf32>
    %2 = tpu.matmul %1, %0, %cst {dimension_numbers = #tpu.dot_dimension_numbers<[1], [0], [0], [1], [0, 0, 1, 1], [], []>} : vector<16x4xf32>, vector<4x128xf32>, vector<16x128xf32> -> vector<16x128xf32>
    %c0_3 = arith.constant 0 : index
    %c0_4 = arith.constant 0 : index
    %3 = vector.load %arg3[%c0_3, %c0_4] : memref<16x1xf32, #tpu.memory_space<vmem>>, vector<16x1xf32>
    %4 = vector.broadcast %3 : vector<16x1xf32> to vector<16x128xf32>
    %5 = arith.addf %2, %4 : vector<16x128xf32>
    %cst_5 = arith.constant 0.000000e+00 : f32
    %6 = vector.broadcast %cst_5 : f32 to vector<16x128xf32>
    %7 = arith.maximumf %5, %6 : vector<16x128xf32>
    %c0_6 = arith.constant 0 : index
    %c0_7 = arith.constant 0 : index
    %8 = vector.load %arg4[%c0_6, %c0_7] : memref<2x16xf32, #tpu.memory_space<vmem>>, vector<2x16xf32>
    %cst_8 = arith.constant dense<0.000000e+00> : vector<2x128xf32>
    %9 = tpu.matmul %8, %7, %cst_8 {dimension_numbers = #tpu.dot_dimension_numbers<[1], [0], [0], [1], [0, 0, 1, 1], [], []>} : vector<2x16xf32>, vector<16x128xf32>, vector<2x128xf32> -> vector<2x128xf32>
    %c0_9 = arith.constant 0 : index
    %c0_10 = arith.constant 0 : index
    %10 = vector.load %arg5[%c0_9, %c0_10] : memref<2x1xf32, #tpu.memory_space<vmem>>, vector<2x1xf32>
    %11 = vector.broadcast %10 : vector<2x1xf32> to vector<2x128xf32>
    %12 = arith.addf %9, %11 : vector<2x128xf32>
    %c0_11 = arith.constant 0 : index
    %c0_12 = arith.constant 0 : index
    %13 = vector.load %arg6[%c0_11, %c0_12] : memref<2x128xf32, #tpu.memory_space<vmem>>, vector<2x128xf32>
    tpu.vector_store %arg6[%c0_11, %c0_12], %12 {strides = array<i32>} : memref<2x128xf32, #tpu.memory_space<vmem>>, vector<2x128xf32>,
    return
  }
  func.func @transform_0(%arg0: i32) -> (i32, i32) {
    %c0_i32 = arith.constant 0 : i32
    %c0_i32_0 = arith.constant 0 : i32
    return %c0_i32, %arg0 : i32, i32
  }
  func.func @transform_1(%arg0: i32) -> (i32, i32) {
    %c0_i32 = arith.constant 0 : i32
    %c0_i32_0 = arith.constant 0 : i32
    %c0_i32_1 = arith.constant 0 : i32
    return %c0_i32, %c0_i32_0 : i32, i32
  }
  func.func @transform_2(%arg0: i32) -> (i32, i32) {
    %c0_i32 = arith.constant 0 : i32
    %c0_i32_0 = arith.constant 0 : i32
    %c0_i32_1 = arith.constant 0 : i32
    return %c0_i32, %c0_i32_0 : i32, i32
  }
  func.func @transform_3(%arg0: i32) -> (i32, i32) {
    %c0_i32 = arith.constant 0 : i32
    %c0_i32_0 = arith.constant 0 : i32
    %c0_i32_1 = arith.constant 0 : i32
    return %c0_i32, %c0_i32_0 : i32, i32
  }
  func.func @transform_4(%arg0: i32) -> (i32, i32) {
    %c0_i32 = arith.constant 0 : i32
    %c0_i32_0 = arith.constant 0 : i32
    %c0_i32_1 = arith.constant 0 : i32
    return %c0_i32, %c0_i32_0 : i32, i32
  }
  func.func @transform_5(%arg0: i32) -> (i32, i32) {
    %c0_i32 = arith.constant 0 : i32
    %c0_i32_0 = arith.constant 0 : i32
    return %c0_i32, %arg0 : i32, i32
  }
}

</mosaic_0001>

<llo_original>
// kernel: policy_forward_pallas.1
$region0: #{policy_forward_pallas.1}
  #allocation0 [shape = 'u32[]', space=smem, size = 0x4, offset = 0x4, fixed_abs, tag = 'smem constant byte address 0x4 - core index']
  #allocation1 [shape = 'u32[144,128]{1,0:T(1,128)}', space=vmem, size = 0x12000, scoped, tag = 'internal scratch']
  %s0 = inlined_call_operand.vmem [shape: f32[4,128], index: 0, kind: input, shape index: {}]
  %s1 = inlined_call_operand.vmem [shape: f32[16,4], index: 1, kind: input, shape index: {}]
  %s2 = inlined_call_operand.vmem [shape: f32[16,1], index: 2, kind: input, shape index: {}]
  %s3 = inlined_call_operand.vmem [shape: f32[2,16], index: 3, kind: input, shape index: {}]
  %s4 = inlined_call_operand.vmem [shape: f32[2,1], index: 4, kind: input, shape index: {}]
  %s5 = inlined_call_operand.vmem [shape: f32[2,128], index: 5, kind: output, shape index: {}]
  %s6 = sld [smem:[#allocation0]]
  $region30: #{policy_forward_pallas.1} parent=0
    _
  %s8 = ssub.s32 1, %s6
  %s9 = scalar_select 0, %s8, %s6
  // Predicated region
  $region2: #{policy_forward_pallas.1} parent=0 // pred_check
    _
  $region3: #{policy_forward_pallas.1} parent=0 // pred_check_branch
    %11 = sbr.rel (0) target = $region5
  $region4: #{policy_forward_pallas.1} parent=0 // pred_region
    _
  $region5: #{policy_forward_pallas.1} parent=0 // pred_fallthru
    _
  // Predicated region
  $region6: #{policy_forward_pallas.1} parent=0 // pred_check
    _
  $region7: #{policy_forward_pallas.1} parent=0 // pred_check_branch
    %13 = sbr.rel (0) target = $region9
  $region8: #{policy_forward_pallas.1} parent=0 // pred_region
    _
  $region9: #{policy_forward_pallas.1} parent=0 // pred_fallthru
    _
  // Predicated region
  $region10: #{policy_forward_pallas.1} parent=0 // pred_check
    _
  $region11: #{policy_forward_pallas.1} parent=0 // pred_check_branch
    %15 = sbr.rel (0) target = $region13
  $region12: #{policy_forward_pallas.1} parent=0 // pred_region
    _
  $region13: #{policy_forward_pallas.1} parent=0 // pred_fallthru
    _
  // Predicated region
  $region14: #{policy_forward_pallas.1} parent=0 // pred_check
    _
  $region15: #{policy_forward_pallas.1} parent=0 // pred_check_branch
    %17 = sbr.rel (0) target = $region17
  $region16: #{policy_forward_pallas.1} parent=0 // pred_region
    _
  $region17: #{policy_forward_pallas.1} parent=0 // pred_fallthru
    _
  // Predicated region
  $region18: #{policy_forward_pallas.1} parent=0 // pred_check
    _
  $region19: #{policy_forward_pallas.1} parent=0 // pred_check_branch
    %19 = sbr.rel (0) target = $region21
  $region20: #{policy_forward_pallas.1} parent=0 // pred_region
    _
  $region21: #{policy_forward_pallas.1} parent=0 // pred_fallthru
    _
  %v20 = vld [vmem:[%s0] sm:$0xf]
  %v21 = vld [vmem:[%s1] sm:$0xff]
  %v22 = vld [vmem:[%s1 + $0x8] sm:$0xff]
  %v23 = vld [vmem:[%s2] sm:$0xff]
  %v24 = vld [vmem:[%s2 + $0x8] sm:$0xff]
  %26 = vset.pattern.permute.xlu0 0
  %27 = vperm.xlu0 %26, %v23
  %v28 = vpop.permute.xlu0 %27
  %31 = vset.pattern.permute.xlu0 0
  %32 = vperm.xlu0 %31, %v24
  %v33 = vpop.permute.xlu0 %32
  %vm35 = vcmask 31744
  %v37 = vsel %vm35, %v21, 0
  %v40 = vsel %vm35, %v22, 0
  %vm42 = vcmask 1043456
  %v44 = vsel %vm42, %v20, 0
  %46 = vmatprep.subr.mxu0 0.0
  %47 = vmatpush1.msra.mxu0 0.0
  %48 = vmatprep.subr.mxu0 0.0
  %49 = vmatpush1.msra.mxu0 0.0
  %50 = vmatprep.subr.mxu0 0.0
  %51 = vmatpush1.msra.mxu0 0.0
  %52 = vmatprep.subr.mxu0 0.0
  %53 = vmatpush1.msra.mxu0 0.0
  %54 = vmatprep.subr.mxu0 0.0
  %55 = vmatpush1.msra.mxu0 0.0
  %56 = vmatprep.subr.mxu0 0.0
  %57 = vmatpush1.msra.mxu0 0.0
  %58 = vmatprep.subr.mxu0 0.0
  %59 = vmatpush1.msra.mxu0 0.0
  %60 = vmatprep.subr.mxu0 0.0
  %61 = vmatpush1.msra.mxu0 0.0
  %62 = vmatprep.subr.mxu0 0.0
  %63 = vmatpush1.msra.mxu0 0.0
  %64 = vmatprep.subr.mxu0 0.0
  %65 = vmatpush1.msra.mxu0 0.0
  %66 = vmatprep.subr.mxu0 0.0
  %67 = vmatpush1.msra.mxu0 0.0
  %68 = vmatprep.subr.mxu0 0.0
  %69 = vmatpush1.msra.mxu0 0.0
  %70 = vmatprep.subr.mxu0 0.0
  %71 = vmatpush1.msra.mxu0 0.0
  %72 = vmatprep.subr.mxu0 0.0
  %73 = vmatpush1.msra.mxu0 0.0
  %74 = vmatprep.subr.mxu0 0.0
  %75 = vmatpush1.msra.mxu0 0.0
  %76 = vmatprep.subr.mxu0 0.0
  %77 = vmatpush1.msra.mxu0 %v44
  %78 = vmatprep.subr.mxu0 0.0
  %79 = vmatpush2.msra.mxu0 0.0
  %80 = vmatprep.subr.mxu0 0.0
  %81 = vmatpush2.msra.mxu0 0.0
  %82 = vmatprep.subr.mxu0 0.0
  %83 = vmatpush2.msra.mxu0 0.0
  %84 = vmatprep.subr.mxu0 0.0
  %85 = vmatpush2.msra.mxu0 0.0
  %86 = vmatprep.subr.mxu0 0.0
  %87 = vmatpush2.msra.mxu0 0.0
  %88 = vmatprep.subr.mxu0 0.0
  %89 = vmatpush2.msra.mxu0 0.0
  %90 = vmatprep.subr.mxu0 0.0
  %91 = vmatpush2.msra.mxu0 0.0
  %92 = vmatprep.subr.mxu0 0.0
  %93 = vmatpush2.msra.mxu0 0.0
  %94 = vmatprep.subr.mxu0 0.0
  %95 = vmatpush2.msra.mxu0 0.0
  %96 = vmatprep.subr.mxu0 0.0
  %97 = vmatpush2.msra.mxu0 0.0
  %98 = vmatprep.subr.mxu0 0.0
  %99 = vmatpush2.msra.mxu0 0.0
  %100 = vmatprep.subr.mxu0 0.0
  %101 = vmatpush2.msra.mxu0 0.0
  %102 = vmatprep.subr.mxu0 0.0
  %103 = vmatpush2.msra.mxu0 0.0
  %104 = vmatprep.subr.mxu0 0.0
  %105 = vmatpush2.msra.mxu0 0.0
  %106 = vmatprep.subr.mxu0 0.0
  %107 = vmatpush2.msra.mxu0 0.0
  %108 = vmatprep.subr.mxu0 0.0
  %109 = vmatpush2.msra.mxu0 0.0
  %110 = vmatprep.mubr.f32.mxu0 0.0
  %111 = vmatmul.mubr.f32.gmra.mxu0 %v37
  %v112 = vpop.f32.mrf.mxu0
  %v113 = vadd.f32 %v28, %v112
  %v114 = vpop.f32.mrf.mxu0
  %115 = vmatprep.mubr.f32.mxu0 0.0
  %116 = vmatmul.mubr.f32.gmra.mxu0 %v40
  %v117 = vpop.f32.mrf.mxu0
  %v118 = vadd.f32 %v33, %v117
  %v119 = vpop.f32.mrf.mxu0
  %120 = vdwg.mxu0
  %v121 = vmax.f32 %v113, 0.0
  %v122 = vmax.f32 %v118, 0.0
  %v123 = vld [vmem:[%s3] sm:$0x3]
  %v124 = vld [vmem:[%s4] sm:$0x3]
  %126 = vset.pattern.permute.xlu0 0
  %127 = vperm.xlu0 %126, %v124
  %v128 = vpop.permute.xlu0 %127
  %vm130 = vcmask 130048
  %v132 = vsel %vm130, %v123, 0
  %134 = vmatprep.subr.mxu0 0.0
  %135 = vmatpush1.msra.mxu0 0.0
  %136 = vmatprep.subr.mxu0 0.0
  %137 = vmatpush1.msra.mxu0 0.0
  %138 = vmatprep.subr.mxu0 0.0
  %139 = vmatpush1.msra.mxu0 0.0
  %140 = vmatprep.subr.mxu0 0.0
  %141 = vmatpush1.msra.mxu0 0.0
  %142 = vmatprep.subr.mxu0 0.0
  %143 = vmatpush1.msra.mxu0 0.0
  %144 = vmatprep.subr.mxu0 0.0
  %145 = vmatpush1.msra.mxu0 0.0
  %146 = vmatprep.subr.mxu0 0.0
  %147 = vmatpush1.msra.mxu0 0.0
  %148 = vmatprep.subr.mxu0 0.0
  %149 = vmatpush1.msra.mxu0 0.0
  %150 = vmatprep.subr.mxu0 0.0
  %151 = vmatpush1.msra.mxu0 0.0
  %152 = vmatprep.subr.mxu0 0.0
  %153 = vmatpush1.msra.mxu0 0.0
  %154 = vmatprep.subr.mxu0 0.0
  %155 = vmatpush1.msra.mxu0 0.0
  %156 = vmatprep.subr.mxu0 0.0
  %157 = vmatpush1.msra.mxu0 0.0
  %158 = vmatprep.subr.mxu0 0.0
  %159 = vmatpush1.msra.mxu0 0.0
  %160 = vmatprep.subr.mxu0 0.0
  %161 = vmatpush1.msra.mxu0 0.0
  %162 = vmatprep.subr.mxu0 0.0
  %163 = vmatpush1.msra.mxu0 %v122
  %164 = vmatprep.subr.mxu0 0.0
  %165 = vmatpush1.msra.mxu0 %v121
  %166 = vmatprep.subr.mxu0 0.0
  %167 = vmatpush2.msra.mxu0 0.0
  %168 = vmatprep.subr.mxu0 0.0
  %169 = vmatpush2.msra.mxu0 0.0
  %170 = vmatprep.subr.mxu0 0.0
  %171 = vmatpush2.msra.mxu0 0.0
  %172 = vmatprep.subr.mxu0 0.0
  %173 = vmatpush2.msra.mxu0 0.0
  %174 = vmatprep.subr.mxu0 0.0
  %175 = vmatpush2.msra.mxu0 0.0
  %176 = vmatprep.subr.mxu0 0.0
  %177 = vmatpush2.msra.mxu0 0.0
  %178 = vmatprep.subr.mxu0 0.0
  %179 = vmatpush2.msra.mxu0 0.0
  %180 = vmatprep.subr.mxu0 0.0
  %181 = vmatpush2.msra.mxu0 0.0
  %182 = vmatprep.subr.mxu0 0.0
  %183 = vmatpush2.msra.mxu0 0.0
  %184 = vmatprep.subr.mxu0 0.0
  %185 = vmatpush2.msra.mxu0 0.0
  %186 = vmatprep.subr.mxu0 0.0
  %187 = vmatpush2.msra.mxu0 0.0
  %188 = vmatprep.subr.mxu0 0.0
  %189 = vmatpush2.msra.mxu0 0.0
  %190 = vmatprep.subr.mxu0 0.0
  %191 = vmatpush2.msra.mxu0 0.0
  %192 = vmatprep.subr.mxu0 0.0
  %193 = vmatpush2.msra.mxu0 0.0
  %194 = vmatprep.subr.mxu0 0.0
  %195 = vmatpush2.msra.mxu0 0.0
  %196 = vmatprep.subr.mxu0 0.0
  %197 = vmatpush2.msra.mxu0 0.0
  %198 = vmatprep.mubr.f32.mxu0 0.0
  %199 = vmatmul.mubr.f32.gmra.mxu0 %v132
  %v200 = vpop.f32.mrf.mxu0
  %v201 = vadd.f32 %v128, %v200
  %v202 = vpop.f32.mrf.mxu0
  %203 = vdwg.mxu0
  %204 = vst [vmem:[%s5] sm:$0x3] %v201
  // Predicated region
  $region22: #{policy_forward_pallas.1} parent=0 // pred_check
    _
  $region23: #{policy_forward_pallas.1} parent=0 // pred_check_branch
    %206 = sbr.rel (0) target = $region25
  $region24: #{policy_forward_pallas.1} parent=0 // pred_region
    _
  $region25: #{policy_forward_pallas.1} parent=0 // pred_fallthru
    _
  // Predicated region
  $region26: #{policy_forward_pallas.1} parent=0 // pred_check
    _
  $region27: #{policy_forward_pallas.1} parent=0 // pred_check_branch
    %208 = sbr.rel (0) target = $region29
  $region28: #{policy_forward_pallas.1} parent=0 // pred_region
    _
  $region29: #{policy_forward_pallas.1} parent=0 // pred_fallthru
    _

</llo_original>
